<compile_context>
chip_gen: v7x
topology: tpu7x:2x2x1
jax: 0.10.0
libtpu: 0.0.40
codegen_flags: <defaults>
</compile_context>

<pallas_src>
import jax
import jax.numpy as jnp
from jax.experimental import pallas as pl
from jax.experimental.pallas import tpu as pltpu

# ---------------------------------------------------------------------------
# Problem sizes (small, TPU-tile friendly: B multiple of 8, S/D multiples of 128)
# ---------------------------------------------------------------------------
B = 16      # rows of x (softmax batch)
S = 128     # softmax / contraction length
D = 128     # output feature dim of y

EMBED_VOCAB = 32   # from Model.__init__ (nn.Embedding(32, 11)) — dead branch


# ---------------------------------------------------------------------------
# Pallas kernel: fused row-softmax followed by matmul against y (single MXU issue)
# ---------------------------------------------------------------------------
def softmax_matmul_kernel(x_ref, y_ref, o_ref):
    x = x_ref[...]                                            # (B, S) f32
    m = jnp.max(x, axis=-1, keepdims=True)                    # stable softmax (XLU)
    e = jnp.exp(x - m)                                        # EUP
    # One exact reciprocal per row (B, 1); exact is free at this size and keeps
    # tight parity with the PyTorch softmax division.
    r = pl.reciprocal(jnp.sum(e, axis=-1, keepdims=True), approx=False)
    # Unnormalized probs through the MXU; scale the (B, D) result afterwards.
    # (If D ever grows past S, move the scale onto `e` pre-matmul instead —
    #  the pre-matmul form scales with S, the post-matmul form with D.)
    o = jnp.dot(e, y_ref[...], preferred_element_type=jnp.float32)
    o_ref[...] = o * r


def softmax_matmul(x, y):
    """softmax(x, axis=-1) @ y as one full-array VMEM block (no grid)."""
    b, s = x.shape
    s2, d = y.shape
    assert s == s2
    cost = pl.CostEstimate(
        flops=2 * b * s * d,
        transcendentals=b * s,                       # exp per score
        bytes_accessed=4 * (b * s + s * d + b * d),  # f32 in/out HBM traffic
    )
    return pl.pallas_call(
        softmax_matmul_kernel,
        out_shape=jax.ShapeDtypeStruct((b, d), jnp.float32),
        in_specs=[
            pl.BlockSpec(memory_space=pltpu.MemorySpace.VMEM),  # full x
            pl.BlockSpec(memory_space=pltpu.MemorySpace.VMEM),  # full y resident
        ],
        out_specs=pl.BlockSpec(memory_space=pltpu.MemorySpace.VMEM),
        cost_estimate=cost,
    )(x, y)


# ---------------------------------------------------------------------------
# Forward: matches Model.forward's *returned* value.  Jitted so the ~1 µs
# kernel is not swamped by per-call Python/dispatch overhead.
# ---------------------------------------------------------------------------
@jax.jit
def model_forward(src, tgt, x, y):
    # TODO(synk): embedding + dropout + nn.Transformer + cat + view + fc branch
    # omitted: its result `v` is discarded by the PyTorch forward (and depends
    # on training-mode dropout), so it cannot affect the returned value.
    del src, tgt
    # Live path (the actual return of Model.forward): matmul(softmax(x), y).
    return softmax_matmul(x, y)


# ---------------------------------------------------------------------------
if __name__ == "__main__":
    key = jax.random.PRNGKey(0)
    k_src, k_tgt, k_x, k_y = jax.random.split(key, 4)

    src = jax.random.randint(k_src, (8,), 0, EMBED_VOCAB, dtype=jnp.int32)
    tgt = jax.random.randint(k_tgt, (8,), 0, EMBED_VOCAB, dtype=jnp.int32)
    x = jax.random.normal(k_x, (B, S), jnp.float32)
    y = jax.random.normal(k_y, (S, D), jnp.float32)

    out = model_forward(src, tgt, x, y)
    out = jax.block_until_ready(out)

    # Reference check against plain-JAX softmax @ matmul.  Exact reciprocal in
    # the kernel keeps the error at f32 rounding level.
    ref = jnp.dot(jax.nn.softmax(x, axis=-1), y)
    assert out.shape == (B, D)
    assert jnp.allclose(out, ref, atol=1e-4, rtol=1e-4), "mismatch vs reference"

    print("KERNEL_OK")
</pallas_src>

<mosaic_0001>
module attributes {stable_mosaic.version = 11 : i64} {
  func.func @softmax_matmul_kernel(%arg0: memref<16x128xf32, #tpu.memory_space<vmem>>, %arg1: memref<128x128xf32, #tpu.memory_space<vmem>>, %arg2: memref<16x128xf32, #tpu.memory_space<vmem>>) attributes {dimension_semantics = [], scalar_prefetch = 0 : i64, scratch_operands = 0 : i64, tpu.core_type = #tpu.core_type<tc>} {
    %c0 = arith.constant 0 : index
    %c0_0 = arith.constant 0 : index
    %0 = vector.load %arg0[%c0, %c0_0] : memref<16x128xf32, #tpu.memory_space<vmem>>, vector<16x128xf32>
    %cst = arith.constant dense<0xFF800000> : vector<16xf32>
    %1 = vector.multi_reduction <maximumf>, %0, %cst [1] : vector<16x128xf32> to vector<16xf32>
    %2 = vector.shape_cast %1 : vector<16xf32> to vector<16x1xf32>
    %3 = vector.broadcast %2 : vector<16x1xf32> to vector<16x128xf32>
    %4 = arith.subf %0, %3 : vector<16x128xf32>
    %5 = math.exp %4 : vector<16x128xf32>
    %cst_1 = arith.constant dense<0.000000e+00> : vector<16xf32>
    %6 = vector.multi_reduction <add>, %5, %cst_1 [1] : vector<16x128xf32> to vector<16xf32>
    %7 = vector.shape_cast %6 : vector<16xf32> to vector<16x1xf32>
    %8 = tpu.reciprocal %7 : vector<16x1xf32> -> vector<16x1xf32>
    %c0_2 = arith.constant 0 : index
    %c0_3 = arith.constant 0 : index
    %9 = vector.load %arg1[%c0_2, %c0_3] : memref<128x128xf32, #tpu.memory_space<vmem>>, vector<128x128xf32>
    %cst_4 = arith.constant dense<0.000000e+00> : vector<16x128xf32>
    %10 = tpu.matmul %5, %9, %cst_4 {dimension_numbers = #tpu.dot_dimension_numbers<[1], [0], [0], [1], [0, 0, 1, 1], [], []>} : vector<16x128xf32>, vector<128x128xf32>, vector<16x128xf32> -> vector<16x128xf32>
    %11 = vector.broadcast %8 : vector<16x1xf32> to vector<16x128xf32>
    %12 = arith.mulf %10, %11 : vector<16x128xf32>
    %c0_5 = arith.constant 0 : index
    %c0_6 = arith.constant 0 : index
    %13 = vector.load %arg2[%c0_5, %c0_6] : memref<16x128xf32, #tpu.memory_space<vmem>>, vector<16x128xf32>
    tpu.vector_store %arg2[%c0_5, %c0_6], %12 {strides = array<i32>} : memref<16x128xf32, #tpu.memory_space<vmem>>, vector<16x128xf32>,
    return
  }
}

</mosaic_0001>

<llo_original>
// kernel: model_forward.1
$region0: #{model_forward.1}
  #allocation0 [shape = 'u32[]', space=smem, size = 0x4, offset = 0x4, fixed_abs, tag = 'smem constant byte address 0x4 - core index']
  #allocation1 [shape = 'u32[144,128]{1,0:T(1,128)}', space=vmem, size = 0x12000, scoped, tag = 'internal scratch']
  %s0 = inlined_call_operand.hbm [shape: f32[16,128], index: 0, kind: input, shape index: {}]
  %s1 = inlined_call_operand.hbm [shape: f32[128,128], index: 1, kind: input, shape index: {}]
  %s2 = inlined_call_operand.hbm [shape: f32[16,128], index: 2, kind: output, shape index: {}]
  %s3 = sld [smem:[#allocation0]]
  $region26: #{model_forward.1} parent=0
    _
  %s5 = ssub.s32 1, %s3
  %s6 = scalar_select 0, %s5, %s3
  $region1: #{model_forward.1} parent=0
    #allocation2 [shape = 'u8[8192]{0}', space=vmem, size = 0x2000, scoped, tag = 'input window, operand 0, single buffered']
    #allocation3 [shape = 's32[1]{0}', space=sflag, size = 0x4, scoped, tag = 'scoped memory for model_forward.1']
    #allocation4 [shape = 's32[1]{0}', space=sflag, size = 0x4, scoped, tag = 'scoped memory for model_forward.1']
    #allocation5 [shape = 'u8[65536]{0}', space=vmem, size = 0x10000, scoped, tag = 'input window, operand 1, single buffered']
    #allocation6 [shape = 's32[1]{0}', space=sflag, size = 0x4, scoped, tag = 'scoped memory for model_forward.1']
    #allocation7 [shape = 'u8[8192]{0}', space=vmem, size = 0x2000, scoped, tag = 'output window, operand 0, single buffered']
    %7 = vsyncpa [#allocation3], 0
    %8 = vsyncpa [#allocation6], 0
    %9 = vsyncpa [#allocation4], 0
    // Predicated region
    $region2: #{model_forward.1} parent=1 // pred_check
      _
    $region3: #{model_forward.1} parent=1 // pred_check_branch
      %11 = sbr.rel (0) target = $region5
    $region4: #{model_forward.1} parent=1 // pred_region
      %s13 = ssub.s32 256, 256
      %14 = vsyncadd [#allocation3], %s13
      %s15 = sshll.u32 [#allocation2], 4
      %s16 = int_to_ptr.vmem [resolvable:$true] %s15
      %21 = dma.hbm_to_vmem [thread:$0]  %s0, 256, %s16, [#allocation3], 128, 128, 8
    $region5: #{model_forward.1} parent=1 // pred_fallthru
      _
    // Predicated region
    $region6: #{model_forward.1} parent=1 // pred_check
      _
    $region7: #{model_forward.1} parent=1 // pred_check_branch
      %23 = sbr.rel (0) target = $region9
    $region8: #{model_forward.1} parent=1 // pred_region
      %s25 = ssub.s32 2048, 2048
      %26 = vsyncadd [#allocation6], %s25
      %s27 = sshll.u32 [#allocation5], 4
      %s28 = int_to_ptr.vmem [resolvable:$true] %s27
      %33 = dma.hbm_to_vmem [thread:$0]  %s1, 2048, %s28, [#allocation6], 128, 128, 8
    $region9: #{model_forward.1} parent=1 // pred_fallthru
      _
    // Predicated region
    $region10: #{model_forward.1} parent=1 // pred_check
      _
    $region11: #{model_forward.1} parent=1 // pred_check_branch
      %35 = sbr.rel (0) target = $region13
    $region12: #{model_forward.1} parent=1 // pred_region
      %36 = dma.done [#allocation3], 256
    $region13: #{model_forward.1} parent=1 // pred_fallthru
      _
    // Predicated region
    $region14: #{model_forward.1} parent=1 // pred_check
      _
    $region15: #{model_forward.1} parent=1 // pred_check_branch
      %38 = sbr.rel (0) target = $region17
    $region16: #{model_forward.1} parent=1 // pred_region
      %39 = dma.done [#allocation6], 2048
    $region17: #{model_forward.1} parent=1 // pred_fallthru
      _
    %v40 = vld [vmem:[#allocation2] sm:$0xff]
    %v41 = vld [vmem:[#allocation2 + $0x8] sm:$0xff]
    %42 = vmax.xlane.f32.xlu0 %v40
    %v43 = vpop.xlane.xlu0 %42
    %44 = vmax.xlane.f32.xlu0 %v41
    %v45 = vpop.xlane.xlu0 %44
    %v46 = vsub.f32 %v40, %v43
    %v47 = vsub.f32 %v41, %v45
    %v48 = vmul.f32 %v46, 1.442695
    %v49 = vpow.pop %v48
    %v50 = vmul.f32 %v47, 1.442695
    %v51 = vpow.pop %v50
    %52 = vadd.xlane.f32.xlu0 %v49
    %v53 = vpop.xlane.xlu0 %52
    %54 = vadd.xlane.f32.xlu0 %v51
    %v55 = vpop.xlane.xlu0 %54
    %v56 = vrcp.pop %v53
    %v57 = vrcp.pop %v55
    %v58 = vld [vmem:[#allocation5] sm:$0xff]
    %v59 = vld [vmem:[#allocation5 + $0x8] sm:$0xff]
    %v60 = vld [vmem:[#allocation5 + $0x10] sm:$0xff]
    %v61 = vld [vmem:[#allocation5 + $0x18] sm:$0xff]
    %v62 = vld [vmem:[#allocation5 + $0x20] sm:$0xff]
    %v63 = vld [vmem:[#allocation5 + $0x28] sm:$0xff]
    %v64 = vld [vmem:[#allocation5 + $0x30] sm:$0xff]
    %v65 = vld [vmem:[#allocation5 + $0x38] sm:$0xff]
    %v66 = vld [vmem:[#allocation5 + $0x40] sm:$0xff]
    %v67 = vld [vmem:[#allocation5 + $0x48] sm:$0xff]
    %v68 = vld [vmem:[#allocation5 + $0x50] sm:$0xff]
    %v69 = vld [vmem:[#allocation5 + $0x58] sm:$0xff]
    %v70 = vld [vmem:[#allocation5 + $0x60] sm:$0xff]
    %v71 = vld [vmem:[#allocation5 + $0x68] sm:$0xff]
    %v72 = vld [vmem:[#allocation5 + $0x70] sm:$0xff]
    %v73 = vld [vmem:[#allocation5 + $0x78] sm:$0xff]
    %74 = vmatprep.subr.mxu0 0.0
    %75 = vmatpush1.msra.mxu0 %v58
    %76 = vmatprep.subr.mxu0 0.0
    %77 = vmatpush1.msra.mxu0 %v59
    %78 = vmatprep.subr.mxu0 0.0
    %79 = vmatpush1.msra.mxu0 %v60
    %80 = vmatprep.subr.mxu0 0.0
    %81 = vmatpush1.msra.mxu0 %v61
    %82 = vmatprep.subr.mxu0 0.0
    %83 = vmatpush1.msra.mxu0 %v62
    %84 = vmatprep.subr.mxu0 0.0
    %85 = vmatpush1.msra.mxu0 %v63
    %86 = vmatprep.subr.mxu0 0.0
    %87 = vmatpush1.msra.mxu0 %v64
    %88 = vmatprep.subr.mxu0 0.0
    %89 = vmatpush1.msra.mxu0 %v65
    %90 = vmatprep.subr.mxu0 0.0
    %91 = vmatpush1.msra.mxu0 %v66
    %92 = vmatprep.subr.mxu0 0.0
    %93 = vmatpush1.msra.mxu0 %v67
    %94 = vmatprep.subr.mxu0 0.0
    %95 = vmatpush1.msra.mxu0 %v68
    %96 = vmatprep.subr.mxu0 0.0
    %97 = vmatpush1.msra.mxu0 %v69
    %98 = vmatprep.subr.mxu0 0.0
    %99 = vmatpush1.msra.mxu0 %v70
    %100 = vmatprep.subr.mxu0 0.0
    %101 = vmatpush1.msra.mxu0 %v71
    %102 = vmatprep.subr.mxu0 0.0
    %103 = vmatpush1.msra.mxu0 %v72
    %104 = vmatprep.subr.mxu0 0.0
    %105 = vmatpush1.msra.mxu0 %v73
    %106 = vmatprep.subr.mxu0 0.0
    %107 = vmatpush1.msra.mxu0 0.0
    %108 = vmatprep.subr.mxu0 0.0
    %109 = vmatpush1.msra.mxu0 0.0
    %110 = vmatprep.subr.mxu0 0.0
    %111 = vmatpush1.msra.mxu0 0.0
    %112 = vmatprep.subr.mxu0 0.0
    %113 = vmatpush1.msra.mxu0 0.0
    %114 = vmatprep.subr.mxu0 0.0
    %115 = vmatpush1.msra.mxu0 0.0
    %116 = vmatprep.subr.mxu0 0.0
    %117 = vmatpush1.msra.mxu0 0.0
    %118 = vmatprep.subr.mxu0 0.0
    %119 = vmatpush1.msra.mxu0 0.0
    %120 = vmatprep.subr.mxu0 0.0
    %121 = vmatpush1.msra.mxu0 0.0
    %122 = vmatprep.subr.mxu0 0.0
    %123 = vmatpush1.msra.mxu0 0.0
    %124 = vmatprep.subr.mxu0 0.0
    %125 = vmatpush1.msra.mxu0 0.0
    %126 = vmatprep.subr.mxu0 0.0
    %127 = vmatpush1.msra.mxu0 0.0
    %128 = vmatprep.subr.mxu0 0.0
    %129 = vmatpush1.msra.mxu0 0.0
    %130 = vmatprep.subr.mxu0 0.0
    %131 = vmatpush1.msra.mxu0 0.0
    %132 = vmatprep.subr.mxu0 0.0
    %133 = vmatpush1.msra.mxu0 0.0
    %134 = vmatprep.subr.mxu0 0.0
    %135 = vmatpush1.msra.mxu0 0.0
    %136 = vmatprep.subr.mxu0 0.0
    %137 = vmatpush1.msra.mxu0 0.0
    %138 = vmatprep.mubr.f32.mxu0 0.0
    %139 = vmatmul.mubr.f32.gmra.mrb[0].mxu0 %v49
    %v140 = vpop.f32.mrb[0].mxu0
    %v141 = vadd.f32 0.0, %v140
    %v142 = vpop.f32.mrb[0].mxu0
    %143 = vmatprep.mubr.f32.mxu0 0.0
    %144 = vmatmul.mubr.f32.gmra.mrb[0].mxu0 %v51
    %v145 = vpop.f32.mrb[0].mxu0
    %v146 = vadd.f32 0.0, %v145
    %v147 = vpop.f32.mrb[0].mxu0
    %148 = vdwg.mxu0
    %v149 = vmul.f32 %v141, %v56
    %v150 = vmul.f32 %v146, %v57
    %151 = vst [vmem:[#allocation7] sm:$0xff] %v149
    %152 = vst [vmem:[#allocation7 + $0x8] sm:$0xff] %v150
    // Predicated region
    $region18: #{model_forward.1} parent=1 // pred_check
      _
    $region19: #{model_forward.1} parent=1 // pred_check_branch
      %154 = sbr.rel (0) target = $region21
    $region20: #{model_forward.1} parent=1 // pred_region
      %s156 = ssub.s32 256, 256
      %157 = vsyncadd [#allocation4], %s156
      %s158 = sshll.u32 [#allocation7], 4
      %s159 = int_to_ptr.vmem [resolvable:$true] %s158
      %164 = dma.vmem_to_hbm [thread:$0]  %s159, 256, %s2, [#allocation4], 128, 128, 8
    $region21: #{model_forward.1} parent=1 // pred_fallthru
      _
    // Predicated region
    $region22: #{model_forward.1} parent=1 // pred_check
      _
    $region23: #{model_forward.1} parent=1 // pred_check_branch
      %166 = sbr.rel (0) target = $region25
    $region24: #{model_forward.1} parent=1 // pred_region
      %167 = dma.done [#allocation4], 256
    $region25: #{model_forward.1} parent=1 // pred_fallthru
      _
    %168 = vsyncpa [#allocation3], 1
    %169 = vsyncpa [#allocation6], 1
    %170 = vsyncpa [#allocation4], 1

</llo_original>
